<compile_context>
chip_gen: v7x
topology: tpu7x:2x2x1
jax: 0.10.0
libtpu: 0.0.40
codegen_flags: <defaults>
</compile_context>

<pallas_src>
import functools

import jax
import jax.numpy as jnp
from jax.experimental import pallas as pl
from jax.experimental.pallas import tpu as pltpu

_EPS = 1e-5  # PyTorch BatchNorm2d default


# ----------------------------------------------------------------------------
# Kernels
# ----------------------------------------------------------------------------
def conv11_bn_relu_kernel(x_ref, y_ref, wx_ref, wy_ref, scale_ref, shift_ref, o_ref):
    # x_ref: (1, Cx, TL) f32, y_ref: (1, Cy, TL) f32      (pixels on lanes)
    # wx_ref: (Cout, Cx) bf16, wy_ref: (Cout, Cy) bf16    (raw conv weights)
    # scale_ref/shift_ref: (Cout, 1) f32                  (BN scale / folded shift)
    # o_ref: (1, Cout, TL) bf16                           (lane-dense output)
    xb = x_ref[0].astype(jnp.bfloat16)
    yb = y_ref[0].astype(jnp.bfloat16)
    acc = jnp.dot(wx_ref[...], xb, preferred_element_type=jnp.float32)
    acc = acc + jnp.dot(wy_ref[...], yb, preferred_element_type=jnp.float32)
    acc = acc * scale_ref[...] + shift_ref[...]
    o_ref[0] = jnp.maximum(acc, 0.0).astype(o_ref.dtype)


def conv33_bn_relu_kernel(xy_ref, w_ref, scale_ref, shift_ref, o_ref, lhs_ref,
                          *, width, cpad):
    # xy_ref:  (1, 1, Cpad, (TH+2)*W + 2) bf16   row-block w/ 1-row halo + 1-lane guards
    # w_ref:   (Cout, 9*Cpad) bf16               raw weights, cols ordered (dy, dx, ci)
    # scale_ref/shift_ref: (Cout, 1) f32
    # o_ref:   (1, Cout, TH*W) bf16              lane-dense output (pixels on lanes)
    # lhs_ref: (9*Cpad, TH*W) bf16               VMEM scratch: channel-major im2col LHS
    L = o_ref.shape[2]
    zero = jnp.zeros((), lhs_ref.dtype)
    col = jax.lax.broadcasted_iota(jnp.int32, (1, L), 1) % width
    kill_left = col == 0              # tap reads column w-1 -> invalid at w == 0
    kill_right = col == width - 1     # tap reads column w+1 -> invalid at w == W-1

    for dy in range(3):
        for dx in range(3):
            # Static window: flat lane (r+dy)*W + (w+dx-1) (+1 halo guard) = dy*W+dx + j
            off = dy * width + dx
            piece = xy_ref[0, 0, :, off:off + L]              # (Cpad, L) bf16
            if dx == 0:
                piece = jnp.where(kill_left, zero, piece)
            elif dx == 2:
                piece = jnp.where(kill_right, zero, piece)
            t = dy * 3 + dx
            # Cpad is the bf16 sublane packing (16) -> full-vreg, unmasked store, no RMW.
            lhs_ref[t * cpad:(t + 1) * cpad, :] = piece

    # Single K = 9*Cpad matmul (one MXU drain) instead of nine small-K matmuls.
    acc = jnp.dot(w_ref[...], lhs_ref[...], preferred_element_type=jnp.float32)
    acc = acc * scale_ref[...] + shift_ref[...]
    o_ref[0] = jnp.maximum(acc, 0.0).astype(o_ref.dtype)


# ----------------------------------------------------------------------------
# Wrappers
# ----------------------------------------------------------------------------
def _fold_bn(bias, gamma, beta, mean, var, eps=_EPS):
    scale = gamma / jnp.sqrt(var + eps)
    shift = (bias - mean) * scale + beta
    return scale.astype(jnp.float32), shift.astype(jnp.float32)


def _round_up(v, m):
    return (v + m - 1) // m * m


def _pick_tl(hw_pad, cx, cy, cout, budget=16 << 20, cap=32768):
    """Largest multiple-of-128 divisor of hw_pad under an explicit VMEM budget."""
    per_lane = 2 * ((cx + cy) * 4 + cout * 2)   # double-buffered f32 inputs + bf16 output
    max_tl = min(cap, max(128, budget // per_lane))
    best, t = 128, 128
    while t <= min(hw_pad, max_tl):
        if hw_pad % t == 0:
            best = t
        t += 128
    return best


def _pick_th(h, w, cpad, cout, budget=12 << 20):
    """Row-block height: divides H, lane-dense (TH*W % 128 == 0), bounded VMEM footprint,
    prefers >=2 blocks so the 3x3 grid has pipeline depth."""
    valid = []
    for th in range(1, h + 1):
        if h % th:
            continue
        if (th * w) % 128 != 0:
            continue
        foot = (9 * cpad * th * w * 2                    # im2col scratch
                + 2 * cpad * ((th + 2) * w + 2) * 2      # double-buffered input block
                + 2 * cout * th * w * 2)                 # double-buffered output block
        if foot <= budget:
            valid.append(th)
    if not valid:
        return h   # awkward W: whole image per step (still correct, small images only)
    multi = [t for t in valid if h // t >= 2]
    return max(multi) if multi else max(valid)


def _conv11_forward(x, y, params):
    N, Cx, H, W = x.shape
    Cy = y.shape[1]
    HW = H * W
    w4 = params["conv11.weight"]                              # (Cout, Cin, 1, 1)
    Cout = w4.shape[0]
    scale, shift = _fold_bn(params["conv11.bias"], params["norm11.weight"],
                            params["norm11.bias"], params["norm11.running_mean"],
                            params["norm11.running_var"])
    w2 = w4.reshape(Cout, Cx + Cy).astype(jnp.bfloat16)       # raw weights only
    wx, wy = w2[:, :Cx], w2[:, Cx:]
    scale = scale.reshape(Cout, 1)
    shift = shift.reshape(Cout, 1)

    # Keep activations f32 in HBM (no standalone cast pass); cast to bf16 in VMEM.
    hw_pad = _round_up(HW, 128)
    xf = x.reshape(N, Cx, HW)
    yf = y.reshape(N, Cy, HW)
    if hw_pad != HW:
        xf = jnp.pad(xf, ((0, 0), (0, 0), (0, hw_pad - HW)))
        yf = jnp.pad(yf, ((0, 0), (0, 0), (0, hw_pad - HW)))

    TL = _pick_tl(hw_pad, Cx, Cy, Cout)
    nblk = hw_pad // TL
    out = pl.pallas_call(
        conv11_bn_relu_kernel,
        out_shape=jax.ShapeDtypeStruct((N, Cout, hw_pad), jnp.bfloat16),
        grid_spec=pltpu.PrefetchScalarGridSpec(
            num_scalar_prefetch=0,
            grid=(N, nblk),
            in_specs=[
                pl.BlockSpec((1, Cx, TL), lambda n, j: (n, 0, j)),
                pl.BlockSpec((1, Cy, TL), lambda n, j: (n, 0, j)),
                pl.BlockSpec((Cout, Cx), lambda n, j: (0, 0)),
                pl.BlockSpec((Cout, Cy), lambda n, j: (0, 0)),
                pl.BlockSpec((Cout, 1), lambda n, j: (0, 0)),
                pl.BlockSpec((Cout, 1), lambda n, j: (0, 0)),
            ],
            out_specs=pl.BlockSpec((1, Cout, TL), lambda n, j: (n, 0, j)),
        ),
        compiler_params=pltpu.CompilerParams(
            dimension_semantics=("parallel", "parallel"),
            vmem_limit_bytes=48 * 1024 * 1024),
    )(xf, yf, wx, wy, scale, shift)
    return out[:, :, :HW].reshape(N, Cout, H, W)


def _conv33_forward(x, y, params):
    N, Cx, H, W = x.shape
    Cy = y.shape[1]
    Cin = Cx + Cy
    HW = H * W
    w = params["conv33.weight"]                               # (Cout, Cin, 3, 3)
    Cout = w.shape[0]
    scale, shift = _fold_bn(params["conv33.bias"], params["norm33.weight"],
                            params["norm33.bias"], params["norm33.running_mean"],
                            params["norm33.running_var"])
    scale = scale.reshape(Cout, 1)
    shift = shift.reshape(Cout, 1)

    # Channels padded to the bf16 sublane packing (16): every im2col tap store in the
    # kernel becomes a full-vreg, unmasked sublane store; padded weight columns are zero.
    Cpad = _round_up(Cin, 16)
    wz = jnp.zeros((Cout, Cpad, 3, 3), w.dtype).at[:, :Cin].set(w)
    w2 = jnp.transpose(wz, (0, 2, 3, 1)).reshape(Cout, 9 * Cpad).astype(jnp.bfloat16)

    TH = _pick_th(H, W, Cpad, Cout)
    nH = H // TH
    Lb = (TH + 2) * W + 2

    # Mandatory materialization pass: channel concat (+ zero channel pad) + bf16 cast +
    # 1-row H padding + per-row-block halo duplication + 1-lane halo guards.  Blocks are
    # non-overlapping so BlockSpec pipelining handles them directly.
    xy = jnp.concatenate(
        [x, y, jnp.zeros((N, Cpad - Cin, H, W), x.dtype)], axis=1).astype(jnp.bfloat16)
    xy = jnp.pad(xy, ((0, 0), (0, 0), (1, 1), (0, 0)))          # (N, Cpad, H+2, W)
    blocks = jnp.stack(
        [xy[:, :, i * TH:i * TH + TH + 2, :] for i in range(nH)], axis=1)
    blocks = blocks.reshape(N, nH, Cpad, (TH + 2) * W)
    blocks = jnp.pad(blocks, ((0, 0), (0, 0), (0, 0), (1, 1)))  # lane halo guards

    out = pl.pallas_call(
        functools.partial(conv33_bn_relu_kernel, width=W, cpad=Cpad),
        out_shape=jax.ShapeDtypeStruct((N, Cout, HW), jnp.bfloat16),
        grid_spec=pltpu.PrefetchScalarGridSpec(
            num_scalar_prefetch=0,
            grid=(N, nH),
            in_specs=[
                pl.BlockSpec((1, 1, Cpad, Lb), lambda n, b: (n, b, 0, 0)),
                pl.BlockSpec((Cout, 9 * Cpad), lambda n, b: (0, 0)),
                pl.BlockSpec((Cout, 1), lambda n, b: (0, 0)),
                pl.BlockSpec((Cout, 1), lambda n, b: (0, 0)),
            ],
            out_specs=pl.BlockSpec((1, Cout, TH * W), lambda n, b: (n, 0, b)),
            scratch_shapes=[pltpu.VMEM((9 * Cpad, TH * W), jnp.bfloat16)],
        ),
        compiler_params=pltpu.CompilerParams(
            dimension_semantics=("parallel", "parallel"),
            vmem_limit_bytes=48 * 1024 * 1024),
    )(blocks, w2, scale, shift)
    return out.reshape(N, Cout, H, W)


@functools.partial(jax.jit, static_argnames=("conv3or1",))
def wblock_forward(x, y, params, conv3or1):
    """wblock.forward: cat(x, y, dim=1) -> conv(1x1 or 3x3) -> BN(eval) -> ReLU (bf16 out)."""
    if conv3or1 == 1:
        return _conv11_forward(x, y, params)
    elif conv3or1 == 3:
        return _conv33_forward(x, y, params)
    raise ValueError("conv3or1 must be 1 or 3")


# ----------------------------------------------------------------------------
# Pure-JAX reference (f32) for correctness
# ----------------------------------------------------------------------------
def wblock_reference(x, y, params, conv3or1, eps=_EPS):
    xc = jnp.concatenate([x, y], axis=1).astype(jnp.float32)
    hi = jax.lax.Precision.HIGHEST
    if conv3or1 == 1:
        w4 = params["conv11.weight"]
        out = jnp.einsum("nchw,oc->nohw", xc, w4.reshape(w4.shape[0], w4.shape[1]),
                         precision=hi)
        out = out + params["conv11.bias"][None, :, None, None]
        g, be, m, v = (params["norm11.weight"], params["norm11.bias"],
                       params["norm11.running_mean"], params["norm11.running_var"])
    else:
        out = jax.lax.conv_general_dilated(
            xc, params["conv33.weight"], (1, 1), ((1, 1), (1, 1)),
            dimension_numbers=("NCHW", "OIHW", "NCHW"), precision=hi)
        out = out + params["conv33.bias"][None, :, None, None]
        g, be, m, v = (params["norm33.weight"], params["norm33.bias"],
                       params["norm33.running_mean"], params["norm33.running_var"])
    scale = g / jnp.sqrt(v + eps)
    out = (out - m[None, :, None, None]) * scale[None, :, None, None] \
        + be[None, :, None, None]
    return jnp.maximum(out, 0.0)


# ----------------------------------------------------------------------------
# Main
# ----------------------------------------------------------------------------
if __name__ == "__main__":
    key = jax.random.PRNGKey(0)
    N, Cx, Cy, H, W = 2, 4, 4, 16, 16          # in_channel=4, y_channel=4
    Cin, Cout = Cx + Cy, 8                      # out_channel=8

    ks = jax.random.split(key, 16)
    x = jax.random.normal(ks[0], (N, Cx, H, W), jnp.float32)
    y = jax.random.normal(ks[1], (N, Cy, H, W), jnp.float32)

    params = {
        # 1x1 branch
        "conv11.weight": 0.1 * jax.random.normal(ks[2], (Cout, Cin, 1, 1), jnp.float32),
        "conv11.bias": 0.1 * jax.random.normal(ks[3], (Cout,), jnp.float32),
        "norm11.weight": 1.0 + 0.1 * jax.random.normal(ks[4], (Cout,), jnp.float32),
        "norm11.bias": 0.1 * jax.random.normal(ks[5], (Cout,), jnp.float32),
        "norm11.running_mean": 0.1 * jax.random.normal(ks[6], (Cout,), jnp.float32),
        "norm11.running_var": 0.5 + jnp.abs(jax.random.normal(ks[7], (Cout,), jnp.float32)),
        # 3x3 branch
        "conv33.weight": 0.1 * jax.random.normal(ks[8], (Cout, Cin, 3, 3), jnp.float32),
        "conv33.bias": 0.1 * jax.random.normal(ks[9], (Cout,), jnp.float32),
        "norm33.weight": 1.0 + 0.1 * jax.random.normal(ks[10], (Cout,), jnp.float32),
        "norm33.bias": 0.1 * jax.random.normal(ks[11], (Cout,), jnp.float32),
        "norm33.running_mean": 0.1 * jax.random.normal(ks[12], (Cout,), jnp.float32),
        "norm33.running_var": 0.5 + jnp.abs(jax.random.normal(ks[13], (Cout,), jnp.float32)),
    }

    ok = True
    for mode in (1, 3):
        out = jax.block_until_ready(wblock_forward(x, y, params, conv3or1=mode))
        ref = wblock_reference(x, y, params, mode)
        # bf16 activations/weights/output with f32 accumulation -> loosened tolerance.
        if not bool(jnp.allclose(out.astype(jnp.float32), ref, rtol=5e-2, atol=5e-2)):
            ok = False
            err = float(jnp.max(jnp.abs(out.astype(jnp.float32) - ref)))
            print(f"mode={mode}: max abs err {err:.4e}")

    if ok:
        print("KERNEL_OK")
</pallas_src>

<mosaic_0001>
module attributes {stable_mosaic.version = 11 : i64} {
  func.func @conv11_bn_relu_kernel(%arg0: i32, %arg1: i32, %arg2: memref<1x4x256xf32, #tpu.memory_space<vmem>>, %arg3: memref<1x4x256xf32, #tpu.memory_space<vmem>>, %arg4: memref<8x4xbf16, #tpu.memory_space<vmem>>, %arg5: memref<8x4xbf16, #tpu.memory_space<vmem>>, %arg6: memref<8x1xf32, #tpu.memory_space<vmem>>, %arg7: memref<8x1xf32, #tpu.memory_space<vmem>>, %arg8: memref<1x8x256xbf16, #tpu.memory_space<vmem>>) attributes {dimension_semantics = [#tpu.dimension_semantics<parallel>, #tpu.dimension_semantics<parallel>], iteration_bounds = array<i64: 2, 1>, scalar_prefetch = 0 : i64, scratch_operands = 0 : i64, tpu.core_type = #tpu.core_type<tc>, window_params = [{transform_indices = @transform_0, window_bounds = array<i64: 1, 4, 256>}, {transform_indices = @transform_1, window_bounds = array<i64: 1, 4, 256>}, {pipeline_mode = #tpu.pipeline_mode<synchronous>, transform_indices = @transform_2, window_bounds = array<i64: 8, 4>}, {pipeline_mode = #tpu.pipeline_mode<synchronous>, transform_indices = @transform_3, window_bounds = array<i64: 8, 4>}, {pipeline_mode = #tpu.pipeline_mode<synchronous>, transform_indices = @transform_4, window_bounds = array<i64: 8, 1>}, {pipeline_mode = #tpu.pipeline_mode<synchronous>, transform_indices = @transform_5, window_bounds = array<i64: 8, 1>}, {transform_indices = @transform_6, window_bounds = array<i64: 1, 8, 256>}]} {
    %c0 = arith.constant 0 : index
    %c0_0 = arith.constant 0 : index
    %c0_1 = arith.constant 0 : index
    %0 = vector.load %arg2[%c0, %c0_0, %c0_1] : memref<1x4x256xf32, #tpu.memory_space<vmem>>, vector<1x4x256xf32>
    %1 = vector.shape_cast %0 : vector<1x4x256xf32> to vector<4x256xf32>
    %2 = arith.truncf %1 : vector<4x256xf32> to vector<4x256xbf16>
    %c0_2 = arith.constant 0 : index
    %c0_3 = arith.constant 0 : index
    %c0_4 = arith.constant 0 : index
    %3 = vector.load %arg3[%c0_2, %c0_3, %c0_4] : memref<1x4x256xf32, #tpu.memory_space<vmem>>, vector<1x4x256xf32>
    %4 = vector.shape_cast %3 : vector<1x4x256xf32> to vector<4x256xf32>
    %5 = arith.truncf %4 : vector<4x256xf32> to vector<4x256xbf16>
    %c0_5 = arith.constant 0 : index
    %c0_6 = arith.constant 0 : index
    %6 = vector.load %arg4[%c0_5, %c0_6] : memref<8x4xbf16, #tpu.memory_space<vmem>>, vector<8x4xbf16>
    %cst = arith.constant dense<0.000000e+00> : vector<8x256xf32>
    %7 = tpu.matmul %6, %2, %cst {dimension_numbers = #tpu.dot_dimension_numbers<[1], [0], [0], [1], [0, 0, 1, 1], [], []>} : vector<8x4xbf16>, vector<4x256xbf16>, vector<8x256xf32> -> vector<8x256xf32>
    %c0_7 = arith.constant 0 : index
    %c0_8 = arith.constant 0 : index
    %8 = vector.load %arg5[%c0_7, %c0_8] : memref<8x4xbf16, #tpu.memory_space<vmem>>, vector<8x4xbf16>
    %cst_9 = arith.constant dense<0.000000e+00> : vector<8x256xf32>
    %9 = tpu.matmul %8, %5, %cst_9 {dimension_numbers = #tpu.dot_dimension_numbers<[1], [0], [0], [1], [0, 0, 1, 1], [], []>} : vector<8x4xbf16>, vector<4x256xbf16>, vector<8x256xf32> -> vector<8x256xf32>
    %10 = arith.addf %7, %9 : vector<8x256xf32>
    %c0_10 = arith.constant 0 : index
    %c0_11 = arith.constant 0 : index
    %11 = vector.load %arg6[%c0_10, %c0_11] : memref<8x1xf32, #tpu.memory_space<vmem>>, vector<8x1xf32>
    %12 = vector.broadcast %11 : vector<8x1xf32> to vector<8x256xf32>
    %13 = arith.mulf %10, %12 : vector<8x256xf32>
    %c0_12 = arith.constant 0 : index
    %c0_13 = arith.constant 0 : index
    %14 = vector.load %arg7[%c0_12, %c0_13] : memref<8x1xf32, #tpu.memory_space<vmem>>, vector<8x1xf32>
    %15 = vector.broadcast %14 : vector<8x1xf32> to vector<8x256xf32>
    %16 = arith.addf %13, %15 : vector<8x256xf32>
    %cst_14 = arith.constant 0.000000e+00 : f32
    %17 = vector.broadcast %cst_14 : f32 to vector<8x256xf32>
    %18 = arith.maximumf %16, %17 : vector<8x256xf32>
    %19 = arith.truncf %18 : vector<8x256xf32> to vector<8x256xbf16>
    %c0_15 = arith.constant 0 : index
    %c0_16 = arith.constant 0 : index
    %c0_17 = arith.constant 0 : index
    %20 = vector.load %arg8[%c0_15, %c0_16, %c0_17] : memref<1x8x256xbf16, #tpu.memory_space<vmem>>, vector<1x8x256xbf16>
    %21 = vector.shape_cast %20 : vector<1x8x256xbf16> to vector<8x256xbf16>
    %22 = vector.shape_cast %19 : vector<8x256xbf16> to vector<1x8x256xbf16>
    tpu.vector_store %arg8[%c0_15, %c0_16, %c0_17], %22 {strides = array<i32>} : memref<1x8x256xbf16, #tpu.memory_space<vmem>>, vector<1x8x256xbf16>,
    return
  }
  func.func @transform_0(%arg0: i32, %arg1: i32) -> (i32, i32, i32) {
    %c0_i32 = arith.constant 0 : i32
    %c0_i32_0 = arith.constant 0 : i32
    return %arg0, %c0_i32, %arg1 : i32, i32, i32
  }
  func.func @transform_1(%arg0: i32, %arg1: i32) -> (i32, i32, i32) {
    %c0_i32 = arith.constant 0 : i32
    %c0_i32_0 = arith.constant 0 : i32
    return %arg0, %c0_i32, %arg1 : i32, i32, i32
  }
  func.func @transform_2(%arg0: i32, %arg1: i32) -> (i32, i32) {
    %c0_i32 = arith.constant 0 : i32
    %c0_i32_0 = arith.constant 0 : i32
    %c0_i32_1 = arith.constant 0 : i32
    return %c0_i32, %c0_i32_0 : i32, i32
  }
  func.func @transform_3(%arg0: i32, %arg1: i32) -> (i32, i32) {
    %c0_i32 = arith.constant 0 : i32
    %c0_i32_0 = arith.constant 0 : i32
    %c0_i32_1 = arith.constant 0 : i32
    return %c0_i32, %c0_i32_0 : i32, i32
  }
  func.func @transform_4(%arg0: i32, %arg1: i32) -> (i32, i32) {
    %c0_i32 = arith.constant 0 : i32
    %c0_i32_0 = arith.constant 0 : i32
    %c0_i32_1 = arith.constant 0 : i32
    return %c0_i32, %c0_i32_0 : i32, i32
  }
  func.func @transform_5(%arg0: i32, %arg1: i32) -> (i32, i32) {
    %c0_i32 = arith.constant 0 : i32
    %c0_i32_0 = arith.constant 0 : i32
    %c0_i32_1 = arith.constant 0 : i32
    return %c0_i32, %c0_i32_0 : i32, i32
  }
  func.func @transform_6(%arg0: i32, %arg1: i32) -> (i32, i32, i32) {
    %c0_i32 = arith.constant 0 : i32
    %c0_i32_0 = arith.constant 0 : i32
    return %arg0, %c0_i32, %arg1 : i32, i32, i32
  }
}

</mosaic_0001>

<llo_original>
// kernel: wblock_forward.1
$region0: #{wblock_forward.1}
  #allocation0 [shape = 'u32[]', space=smem, size = 0x4, offset = 0x4, fixed_abs, tag = 'smem constant byte address 0x4 - core index']
  #allocation1 [shape = 'u32[144,128]{1,0:T(1,128)}', space=vmem, size = 0x12000, scoped, tag = 'internal scratch']
  %s0 = inlined_call_operand.vmem [shape: f32[2,4,256], index: 0, kind: input, shape index: {}]
  %s1 = inlined_call_operand.vmem [shape: f32[2,4,256], index: 1, kind: input, shape index: {}]
  %s2 = inlined_call_operand.vmem [shape: bf16[8,4], index: 2, kind: input, shape index: {}]
  %s3 = inlined_call_operand.vmem [shape: bf16[8,4], index: 3, kind: input, shape index: {}]
  %s4 = inlined_call_operand.vmem [shape: f32[8,1], index: 4, kind: input, shape index: {}]
  %s5 = inlined_call_operand.vmem [shape: f32[8,1], index: 5, kind: input, shape index: {}]
  %s6 = inlined_call_operand.vmem [shape: bf16[2,8,256], index: 6, kind: output, shape index: {}]
  %s7 = sld [smem:[#allocation0]]
  $region57: #{wblock_forward.1} parent=0
    _
  %s9 = ssub.s32 1, %s7
  %s10 = scalar_select 0, %s9, %s7
  loop: start=0, step=1, limit=4
  $region2: #{wblock_forward.1} parent=0 // loop_pre_header
    _
  $region3: #{wblock_forward.1} parent=0 // loop_header
    %s12 = sphi 0, %s16
    %p13 = scmp.ge.s32.totalorder %s12, 4
    %s19 = sphi 0, %s31
    %s20 = sphi 0, %s27
    %s21 = sphi 0, %s19
    %s22 = sphi 0, %s20
    %s23 = sphi 0, %s21
    %s24 = sphi 0, %s22
    %s36 = sphi 0, %s38
    %s39 = sphi 0, %s36
    %s40 = sphi 0, %s39
    %s56 = sphi 0, %s40
    %s64 = sphi 0, %s66
    %s67 = sphi 0, %s64
    %s68 = sphi 0, %s67
    %s84 = sphi 0, %s68
    %s88 = sphi 0, %s88
    %s90 = sphi 0, %s88
    %s91 = sphi 0, %s90
    %s105 = sphi 0, %s91
    %s109 = sphi 0, %s109
    %s111 = sphi 0, %s109
    %s112 = sphi 0, %s111
    %s126 = sphi 0, %s112
    %s130 = sphi 0, %s130
    %s132 = sphi 0, %s130
    %s133 = sphi 0, %s132
    %s147 = sphi 0, %s133
    %s151 = sphi 0, %s151
    %s153 = sphi 0, %s151
    %s154 = sphi 0, %s153
    %s168 = sphi 0, %s154
    %s176 = sphi 0, %s178
    %s179 = sphi 0, %s176
    %s180 = sphi 0, %s179
    %s196 = sphi 0, %s180
  $region4: #{wblock_forward.1} parent=0 // loop_header_branch
    %15 = sbr.rel (%p13) target = $region8
  $region5: #{wblock_forward.1} parent=0 // loop_body
    %s17 = ssub.s32 %s12, 1
    %s18 = ssub.s32 %s12, 2
    %s25 = sadd.s32 1, %s20
    %p26 = scmp.ge.s32.totalorder %s25, 1
    %s27 = scalar_select %p26, 0, %s25
    %s28 = sadd.s32 1, %s19
    %s29 = scalar_select %p26, %s28, %s19
    %p30 = scmp.ge.s32.totalorder %s29, 2
    %s31 = scalar_select %p30, 0, %s29
    %s32 = ssub.s32 %s19, %s31
    %s33 = ssub.s32 %s20, %s27
    %s34 = sor.u32 %s32, %s33
    %p35 = scmp.eq.s32.totalorder %s34, 0
    %s37 = sadd.s32 %s36, 1
    %s38 = scalar_select %p35, %s36, %s37
    %p41 = pneg %p35
    %p42 = scmp.eq.s32.totalorder %s12, 1
    %p43 = por %p41, %p42
    %p44 = scmp.ne.s32.totalorder %s36, %s39
    %p45 = scmp.eq.s32.totalorder %s12, 0
    %p46 = por %p44, %p45
    %p47 = scmp.ne.s32.totalorder %s36, %s39
    %p48 = scmp.eq.s32.totalorder %s17, 1
    %p49 = por %p47, %p48
    %p50 = scmp.ne.s32.totalorder %s39, %s40
    %p51 = scmp.eq.s32.totalorder %s17, 0
    %p52 = por %p50, %p51
    %p53 = scmp.ne.s32.totalorder %s39, %s40
    %p54 = scmp.eq.s32.totalorder %s18, 1
    %p55 = por %p53, %p54
    %p57 = scmp.ne.s32.totalorder %s40, %s56
    %p58 = scmp.eq.s32.totalorder %s18, 0
    %p59 = por %p57, %p58
    %s60 = ssub.s32 %s19, %s31
    %s61 = ssub.s32 %s20, %s27
    %s62 = sor.u32 %s60, %s61
    %p63 = scmp.eq.s32.totalorder %s62, 0
    %s65 = sadd.s32 %s64, 1
    %s66 = scalar_select %p63, %s64, %s65
    %p69 = pneg %p63
    %p70 = scmp.eq.s32.totalorder %s12, 1
    %p71 = por %p69, %p70
    %p72 = scmp.ne.s32.totalorder %s64, %s67
    %p73 = scmp.eq.s32.totalorder %s12, 0
    %p74 = por %p72, %p73
    %p75 = scmp.ne.s32.totalorder %s64, %s67
    %p76 = scmp.eq.s32.totalorder %s17, 1
    %p77 = por %p75, %p76
    %p78 = scmp.ne.s32.totalorder %s67, %s68
    %p79 = scmp.eq.s32.totalorder %s17, 0
    %p80 = por %p78, %p79
    %p81 = scmp.ne.s32.totalorder %s67, %s68
    %p82 = scmp.eq.s32.totalorder %s18, 1
    %p83 = por %p81, %p82
    %p85 = scmp.ne.s32.totalorder %s68, %s84
    %p86 = scmp.eq.s32.totalorder %s18, 0
    %p87 = por %p85, %p86
    %s89 = sadd.s32 %s88, 1
    %p92 = scmp.eq.s32.totalorder %s12, 1
    %p93 = scmp.ne.s32.totalorder %s88, %s90
    %p94 = scmp.eq.s32.totalorder %s12, 0
    %p95 = por %p93, %p94
    %p96 = scmp.ne.s32.totalorder %s88, %s90
    %p97 = scmp.eq.s32.totalorder %s17, 1
    %p98 = por %p96, %p97
    %p99 = scmp.ne.s32.totalorder %s90, %s91
    %p100 = scmp.eq.s32.totalorder %s17, 0
    %p101 = por %p99, %p100
    %p102 = scmp.ne.s32.totalorder %s90, %s91
    %p103 = scmp.eq.s32.totalorder %s18, 1
    %p104 = por %p102, %p103
    %p106 = scmp.ne.s32.totalorder %s91, %s105
    %p107 = scmp.eq.s32.totalorder %s18, 0
    %p108 = por %p106, %p107
    %s110 = sadd.s32 %s109, 1
    %p113 = scmp.eq.s32.totalorder %s12, 1
    %p114 = scmp.ne.s32.totalorder %s109, %s111
    %p115 = scmp.eq.s32.totalorder %s12, 0
    %p116 = por %p114, %p115
    %p117 = scmp.ne.s32.totalorder %s109, %s111
    %p118 = scmp.eq.s32.totalorder %s17, 1
    %p119 = por %p117, %p118
    %p120 = scmp.ne.s32.totalorder %s111, %s112
    %p121 = scmp.eq.s32.totalorder %s17, 0
    %p122 = por %p120, %p121
    %p123 = scmp.ne.s32.totalorder %s111, %s112
    %p124 = scmp.eq.s32.totalorder %s18, 1
    %p125 = por %p123, %p124
    %p127 = scmp.ne.s32.totalorder %s112, %s126
    %p128 = scmp.eq.s32.totalorder %s18, 0
    %p129 = por %p127, %p128
    %s131 = sadd.s32 %s130, 1
    %p134 = scmp.eq.s32.totalorder %s12, 1
    %p135 = scmp.ne.s32.totalorder %s130, %s132
    %p136 = scmp.eq.s32.totalorder %s12, 0
    %p137 = por %p135, %p136
    %p138 = scmp.ne.s32.totalorder %s130, %s132
    %p139 = scmp.eq.s32.totalorder %s17, 1
    %p140 = por %p138, %p139
    %p141 = scmp.ne.s32.totalorder %s132, %s133
    %p142 = scmp.eq.s32.totalorder %s17, 0
    %p143 = por %p141, %p142
    %p144 = scmp.ne.s32.totalorder %s132, %s133
    %p145 = scmp.eq.s32.totalorder %s18, 1
    %p146 = por %p144, %p145
    %p148 = scmp.ne.s32.totalorder %s133, %s147
    %p149 = scmp.eq.s32.totalorder %s18, 0
    %p150 = por %p148, %p149
    %s152 = sadd.s32 %s151, 1
    %p155 = scmp.eq.s32.totalorder %s12, 1
    %p156 = scmp.ne.s32.totalorder %s151, %s153
    %p157 = scmp.eq.s32.totalorder %s12, 0
    %p158 = por %p156, %p157
    %p159 = scmp.ne.s32.totalorder %s151, %s153
    %p160 = scmp.eq.s32.totalorder %s17, 1
    %p161 = por %p159, %p160
    %p162 = scmp.ne.s32.totalorder %s153, %s154
    %p163 = scmp.eq.s32.totalorder %s17, 0
    %p164 = por %p162, %p163
    %p165 = scmp.ne.s32.totalorder %s153, %s154
    %p166 = scmp.eq.s32.totalorder %s18, 1
    %p167 = por %p165, %p166
    %p169 = scmp.ne.s32.totalorder %s154, %s168
    %p170 = scmp.eq.s32.totalorder %s18, 0
    %p171 = por %p169, %p170
    %s172 = ssub.s32 %s19, %s31
    %s173 = ssub.s32 %s20, %s27
    %s174 = sor.u32 %s172, %s173
    %p175 = scmp.eq.s32.totalorder %s174, 0
    %s177 = sadd.s32 %s176, 1
    %s178 = scalar_select %p175, %s176, %s177
    %p181 = pneg %p175
    %p182 = scmp.eq.s32.totalorder %s12, 1
    %p183 = por %p181, %p182
    %p184 = scmp.ne.s32.totalorder %s176, %s179
    %p185 = scmp.eq.s32.totalorder %s12, 0
    %p186 = por %p184, %p185
    %p187 = scmp.ne.s32.totalorder %s176, %s179
    %p188 = scmp.eq.s32.totalorder %s17, 1
    %p189 = por %p187, %p188
    %p190 = scmp.ne.s32.totalorder %s179, %s180
    %p191 = scmp.eq.s32.totalorder %s17, 0
    %p192 = por %p190, %p191
    %p193 = scmp.ne.s32.totalorder %s179, %s180
    %p194 = scmp.eq.s32.totalorder %s18, 1
    %p195 = por %p193, %p194
    %p197 = scmp.ne.s32.totalorder %s180, %s196
    %p198 = scmp.eq.s32.totalorder %s18, 0
    %p199 = por %p197, %p198
    %p200 = scmp.le.s32.totalorder 1, %s12
    %p201 = scmp.lt.s32.totalorder %s12, 3
    %p202 = pnand %p200, %p201
    %p203 = pneg %p202
    // Predicated region
    $region9: #{wblock_forward.1} parent=5 // pred_check
      _
    $region10: #{wblock_forward.1} parent=5 // pred_check_branch
      %205 = sbr.rel (%p202) target = $region12
    $region11: #{wblock_forward.1} parent=5 // pred_region
      %s206 = ssub.s32 %s12, 1
      // Predicated region
      $region13: #{wblock_forward.1} parent=11 // pred_check
        %p207 = pneg %p101
      $region14: #{wblock_forward.1} parent=11 // pred_check_branch
        %209 = sbr.rel (%p207) target = $region16
      $region15: #{wblock_forward.1} parent=11 // pred_region
        _
      $region16: #{wblock_forward.1} parent=11 // pred_fallthru
        _
      // Predicated region
      $region17: #{wblock_forward.1} parent=11 // pred_check
        %p210 = pneg %p122
      $region18: #{wblock_forward.1} parent=11 // pred_check_branch
        %212 = sbr.rel (%p210) target = $region20
      $region19: #{wblock_forward.1} parent=11 // pred_region
        _
      $region20: #{wblock_forward.1} parent=11 // pred_fallthru
        _
      // Predicated region
      $region21: #{wblock_forward.1} parent=11 // pred_check
        %p213 = pneg %p143
      $region22: #{wblock_forward.1} parent=11 // pred_check_branch
        %215 = sbr.rel (%p213) target = $region24
      $region23: #{wblock_forward.1} parent=11 // pred_region
        _
      $region24: #{wblock_forward.1} parent=11 // pred_fallthru
        _
      // Predicated region
      $region25: #{wblock_forward.1} parent=11 // pred_check
        %p216 = pneg %p164
      $region26: #{wblock_forward.1} parent=11 // pred_check_branch
        %218 = sbr.rel (%p216) target = $region28
      $region27: #{wblock_forward.1} parent=11 // pred_region
        _
      $region28: #{wblock_forward.1} parent=11 // pred_fallthru
        _
    $region12: #{wblock_forward.1} parent=5 // pred_fallthru
      _
    %p219 = scmp.lt.s32.totalorder %s12, 2
    // Predicated region
    $region29: #{wblock_forward.1} parent=5 // pred_check
      %p220 = pneg %p219
    $region30: #{wblock_forward.1} parent=5 // pred_check_branch
      %222 = sbr.rel (%p220) target = $region32
    $region31: #{wblock_forward.1} parent=5 // pred_region
      // Predicated region
      $region33: #{wblock_forward.1} parent=31 // pred_check
        %p223 = pneg %p46
      $region34: #{wblock_forward.1} parent=31 // pred_check_branch
        %225 = sbr.rel (%p223) target = $region36
      $region35: #{wblock_forward.1} parent=31 // pred_region
        %s226 = smul.u32 2, %s20
        %p227 = scmp.lt.s32.totalorder %s19, 1
        %s228 = scalar_select %p227, %s19, 1
        %p229 = scmp.lt.s32.totalorder %s226, 1
        %s230 = scalar_select %p229, %s226, 1
        %s231 = smul.addr %s228, 2
        %s232 = sadd.s32 %s230, %s231
        %s233 = smul.addr %s232, 4
        %s234 = scalar_lea.vmem %s0, %s233
        %s235 = smul.u32 2, %s20
      $region36: #{wblock_forward.1} parent=31 // pred_fallthru
        _
      // Predicated region
      $region37: #{wblock_forward.1} parent=31 // pred_check
        %p236 = pneg %p74
      $region38: #{wblock_forward.1} parent=31 // pred_check_branch
        %238 = sbr.rel (%p236) target = $region40
      $region39: #{wblock_forward.1} parent=31 // pred_region
        %s239 = smul.u32 2, %s20
        %p240 = scmp.lt.s32.totalorder %s19, 1
        %s241 = scalar_select %p240, %s19, 1
        %p242 = scmp.lt.s32.totalorder %s239, 1
        %s243 = scalar_select %p242, %s239, 1
        %s244 = smul.addr %s241, 2
        %s245 = sadd.s32 %s243, %s244
        %s246 = smul.addr %s245, 4
        %s247 = scalar_lea.vmem %s1, %s246
        %s248 = smul.u32 2, %s20
      $region40: #{wblock_forward.1} parent=31 // pred_fallthru
        _
    $region32: #{wblock_forward.1} parent=5 // pred_fallthru
      _
    %p249 = scmp.le.s32.totalorder 1, %s12
    %p250 = scmp.lt.s32.totalorder %s12, 3
    %p251 = pnand %p249, %p250
    %p252 = pneg %p251
    // Predicated region
    $region41: #{wblock_forward.1} parent=5 // pred_check
      _
    $region42: #{wblock_forward.1} parent=5 // pred_check_branch
      %254 = sbr.rel (%p251) target = $region44
    $region43: #{wblock_forward.1} parent=5 // pred_region
      %s255 = ssub.s32 %s12, 1
      %s256 = smul.u32 2, %s22
      %p257 = scmp.lt.s32.totalorder %s21, 1
      %s258 = scalar_select %p257, %s21, 1
      %p259 = scmp.lt.s32.totalorder %s256, 1
      %s260 = scalar_select %p259, %s256, 1
      %s261 = smul.addr %s258, 2
      %s262 = sadd.s32 %s260, %s261
      %s263 = smul.addr %s262, 4
      %s264 = scalar_lea.vmem %s0, %s263
      %p265 = pneg %p52
      %p266 = pneg %p49
      %s267 = smul.u32 2, %s22
      %p268 = scmp.lt.s32.totalorder %s21, 1
      %s269 = scalar_select %p268, %s21, 1
      %p270 = scmp.lt.s32.totalorder %s267, 1
      %s271 = scalar_select %p270, %s267, 1
      %s272 = smul.addr %s269, 2
      %s273 = sadd.s32 %s271, %s272
      %s274 = smul.addr %s273, 4
      %s275 = scalar_lea.vmem %s1, %s274
      %p276 = pneg %p80
      %p277 = pneg %p77
      %p278 = pneg %p101
      %p279 = pneg %p98
      %p280 = pneg %p122
      %p281 = pneg %p119
      %p282 = pneg %p143
      %p283 = pneg %p140
      %p284 = pneg %p164
      %p285 = pneg %p161
      %p286 = pneg %p192
      %p287 = pneg %p189
      %s288 = smul.u32 2, %s22
      %p289 = scmp.lt.s32.totalorder %s21, 1
      %s290 = scalar_select %p289, %s21, 1
      %p291 = scmp.lt.s32.totalorder %s288, 1
      %s292 = scalar_select %p291, %s288, 1
      %s293 = smul.addr %s290, 2
      %s294 = sadd.s32 %s292, %s293
      %s295 = smul.addr %s294, 4
      %s296 = scalar_lea.vmem %s6, %s295
      %s297 = smul.u32 2, %s22
      %p298 = scmp.lt.s32.totalorder %s21, 1
      %s299 = scalar_select %p298, %s21, 1
      %p300 = scmp.lt.s32.totalorder %s297, 1
      %s301 = scalar_select %p300, %s297, 1
      %s302 = smul.addr %s299, 2
      %s303 = sadd.s32 %s301, %s302
      %s304 = smul.addr %s303, 4
      %s305 = scalar_lea.vmem %s0, %s304
      %s306 = smul.u32 2, %s22
      %s307 = smul.u32 2, %s22
      %p308 = scmp.lt.s32.totalorder %s21, 1
      %s309 = scalar_select %p308, %s21, 1
      %p310 = scmp.lt.s32.totalorder %s307, 1
      %s311 = scalar_select %p310, %s307, 1
      %s312 = smul.addr %s309, 2
      %s313 = sadd.s32 %s311, %s312
      %s314 = smul.addr %s313, 4
      %s315 = scalar_lea.vmem %s1, %s314
      %s316 = smul.u32 2, %s22
      %s317 = smul.u32 2, %s22
      %p318 = scmp.lt.s32.totalorder %s21, 1
      %s319 = scalar_select %p318, %s21, 1
      %p320 = scmp.lt.s32.totalorder %s317, 1
      %s321 = scalar_select %p320, %s317, 1
      %s322 = smul.addr %s319, 2
      %s323 = sadd.s32 %s321, %s322
      %s324 = smul.addr %s323, 4
      %s325 = scalar_lea.vmem %s6, %s324
      %s326 = smul.u32 2, %s22
      %v328 = vld [vmem:[%s305] sm:$0xff]
      %v330 = vcombine.high %v328, %v328
      %v332 = vpack.c.bf16 %v328, %v328
      %v333 = vpack.c.bf16 %v330, %v330
      %v334 = vld [vmem:[%s315] sm:$0xff]
      %v336 = vcombine.high %v334, %v334
      %v338 = vpack.c.bf16 %v334, %v334
      %v339 = vpack.c.bf16 %v336, %v336
      %v340 = vld [vmem:[%s2] sm:$0xf]
      %v341 = vld [vmem:[%s3] sm:$0xf]
      %vm342 = vcmask 31744
      %v344 = vsel %vm342, %v341, 0
      %vm346 = vcmask 1041408
      %v348 = vsel %vm346, %v338, 0
      %v351 = vsel %vm346, %v339, 0
      %353 = vmatprep.subr.bf16.mxu0 %v351
      %354 = vmatpush1.bf16.msra.mxu0 %v348
      %355 = vmatprep.subr.bf16.mxu0 0
      %356 = vmatpush1.bf16.msra.mxu0 0
      %357 = vmatprep.subr.bf16.mxu0 0
      %358 = vmatpush1.bf16.msra.mxu0 0
      %359 = vmatprep.subr.bf16.mxu0 0
      %360 = vmatpush1.bf16.msra.mxu0 0
      %361 = vmatprep.subr.bf16.mxu0 0
      %362 = vmatpush1.bf16.msra.mxu0 0
      %363 = vmatprep.subr.bf16.mxu0 0
      %364 = vmatpush1.bf16.msra.mxu0 0
      %365 = vmatprep.subr.bf16.mxu0 0
      %366 = vmatpush1.bf16.msra.mxu0 0
      %367 = vmatprep.subr.bf16.mxu0 0
      %368 = vmatpush1.bf16.msra.mxu0 0
      %369 = vmatprep.subr.bf16.mxu0 0
      %370 = vmatpush1.bf16.msra.mxu0 0
      %371 = vmatprep.subr.bf16.mxu0 0
      %372 = vmatpush1.bf16.msra.mxu0 0
      %373 = vmatprep.subr.bf16.mxu0 0
      %374 = vmatpush1.bf16.msra.mxu0 0
      %375 = vmatprep.subr.bf16.mxu0 0
      %376 = vmatpush1.bf16.msra.mxu0 0
      %377 = vmatprep.subr.bf16.mxu0 0
      %378 = vmatpush1.bf16.msra.mxu0 0
      %379 = vmatprep.subr.bf16.mxu0 0
      %380 = vmatpush1.bf16.msra.mxu0 0
      %381 = vmatprep.subr.bf16.mxu0 0
      %382 = vmatpush1.bf16.msra.mxu0 0
      %383 = vmatprep.subr.bf16.mxu0 0
      %384 = vmatpush1.bf16.msra.mxu0 0
      %385 = vmatprep.mubr.bf16.mxu0 0
      %386 = vmatmul.mubr.bf16.gmra.mrb[0].mxu0 %v344
      %v387 = vpop.f32.mrb[0].mxu0
      %v388 = vadd.f32 0.0, %v387
      %v389 = vpop.f32.mrb[0].mxu0
      %v390 = vadd.f32 0.0, %v389
      %v391 = vpop.f32.mrb[0].mxu0
      %v392 = vpop.f32.mrb[0].mxu0
      %393 = vdwg.mxu0
      %v395 = vsel %vm342, %v340, 0
      %v398 = vsel %vm346, %v332, 0
      %v401 = vsel %vm346, %v333, 0
      %403 = vmatprep.subr.bf16.mxu0 %v401
      %404 = vmatpush1.bf16.msra.mxu0 %v398
      %405 = vmatprep.subr.bf16.mxu0 0
      %406 = vmatpush1.bf16.msra.mxu0 0
      %407 = vmatprep.subr.bf16.mxu0 0
      %408 = vmatpush1.bf16.msra.mxu0 0
      %409 = vmatprep.subr.bf16.mxu0 0
      %410 = vmatpush1.bf16.msra.mxu0 0
      %411 = vmatprep.subr.bf16.mxu0 0
      %412 = vmatpush1.bf16.msra.mxu0 0
      %413 = vmatprep.subr.bf16.mxu0 0
      %414 = vmatpush1.bf16.msra.mxu0 0
      %415 = vmatprep.subr.bf16.mxu0 0
      %416 = vmatpush1.bf16.msra.mxu0 0
      %417 = vmatprep.subr.bf16.mxu0 0
      %418 = vmatpush1.bf16.msra.mxu0 0
      %419 = vmatprep.subr.bf16.mxu0 0
      %420 = vmatpush1.bf16.msra.mxu0 0
      %421 = vmatprep.subr.bf16.mxu0 0
      %422 = vmatpush1.bf16.msra.mxu0 0
      %423 = vmatprep.subr.bf16.mxu0 0
      %424 = vmatpush1.bf16.msra.mxu0 0
      %425 = vmatprep.subr.bf16.mxu0 0
      %426 = vmatpush1.bf16.msra.mxu0 0
      %427 = vmatprep.subr.bf16.mxu0 0
      %428 = vmatpush1.bf16.msra.mxu0 0
      %429 = vmatprep.subr.bf16.mxu0 0
      %430 = vmatpush1.bf16.msra.mxu0 0
      %431 = vmatprep.subr.bf16.mxu0 0
      %432 = vmatpush1.bf16.msra.mxu0 0
      %433 = vmatprep.subr.bf16.mxu0 0
      %434 = vmatpush1.bf16.msra.mxu0 0
      %435 = vmatprep.mubr.bf16.mxu0 0
      %436 = vmatmul.mubr.bf16.gmra.mrb[0].mxu0 %v395
      %v437 = vpop.f32.mrb[0].mxu0
      %v438 = vadd.f32 %v388, %v437
      %v439 = vpop.f32.mrb[0].mxu0
      %v440 = vadd.f32 %v390, %v439
      %v441 = vpop.f32.mrb[0].mxu0
      %v442 = vpop.f32.mrb[0].mxu0
      %443 = vdwg.mxu0
      %v444 = vld [vmem:[%s4] sm:$0xff]
      %446 = vset.pattern.permute.xlu0 0
      %447 = vperm.xlu0 %446, %v444
      %v448 = vpop.permute.xlu0 %447
      %v450 = vmul.f32 %v438, %v448
      %v451 = vmul.f32 %v440, %v448
      %v452 = vld [vmem:[%s5] sm:$0xff]
      %454 = vset.pattern.permute.xlu0 0
      %455 = vperm.xlu0 %454, %v452
      %v456 = vpop.permute.xlu0 %455
      %v458 = vadd.f32 %v450, %v456
      %v459 = vadd.f32 %v451, %v456
      %v460 = vmax.f32 %v458, 0.0
      %v461 = vmax.f32 %v459, 0.0
      %v462 = vpack.c.bf16 %v460, %v460
      %v463 = vpack.c.bf16 %v461, %v461
      %v466 = vunpack.c.l.b16 %v462
      %v467 = vunpack.c.l.b16 %v463
      %v468 = vpack.c.b16 %v467, %v466
      %470 = vst [vmem:[%s325] sm:$0xff] %v468
      %s471 = smul.u32 2, %s22
      %p472 = scmp.lt.s32.totalorder %s21, 1
      %s473 = scalar_select %p472, %s21, 1
      %p474 = scmp.lt.s32.totalorder %s471, 1
      %s475 = scalar_select %p474, %s471, 1
      %s476 = smul.addr %s473, 2
      %s477 = sadd.s32 %s475, %s476
      %s478 = smul.addr %s477, 4
      %s479 = scalar_lea.vmem %s6, %s478
      // Predicated region
      $region45: #{wblock_forward.1} parent=43 // pred_check
        %p480 = pneg %p189
      $region46: #{wblock_forward.1} parent=43 // pred_check_branch
        %482 = sbr.rel (%p480) target = $region48
      $region47: #{wblock_forward.1} parent=43 // pred_region
        %s483 = smul.u32 2, %s22
      $region48: #{wblock_forward.1} parent=43 // pred_fallthru
        _
    $region44: #{wblock_forward.1} parent=5 // pred_fallthru
      _
    %p484 = scmp.le.s32.totalorder 2, %s12
    // Predicated region
    $region49: #{wblock_forward.1} parent=5 // pred_check
      %p485 = pneg %p484
    $region50: #{wblock_forward.1} parent=5 // pred_check_branch
      %487 = sbr.rel (%p485) target = $region52
    $region51: #{wblock_forward.1} parent=5 // pred_region
      %s488 = ssub.s32 %s12, 2
      // Predicated region
      $region53: #{wblock_forward.1} parent=51 // pred_check
        %p489 = pneg %p195
      $region54: #{wblock_forward.1} parent=51 // pred_check_branch
        %491 = sbr.rel (%p489) target = $region56
      $region55: #{wblock_forward.1} parent=51 // pred_region
        %s492 = smul.u32 2, %s24
        %p493 = scmp.lt.s32.totalorder %s23, 1
        %s494 = scalar_select %p493, %s23, 1
        %p495 = scmp.lt.s32.totalorder %s492, 1
        %s496 = scalar_select %p495, %s492, 1
        %s497 = smul.addr %s494, 2
        %s498 = sadd.s32 %s496, %s497
        %s499 = smul.addr %s498, 4
        %s500 = scalar_lea.vmem %s6, %s499
      $region56: #{wblock_forward.1} parent=51 // pred_fallthru
        _
    $region52: #{wblock_forward.1} parent=5 // pred_fallthru
      _
  $region6: #{wblock_forward.1} parent=0 // loop_footer
    %s16 = sadd.s32 1, %s12
  $region7: #{wblock_forward.1} parent=0 // loop_footer_branch
    %11 = sbr.rel target = $region3
  $region8: #{wblock_forward.1} parent=0 // loop_exit
    _

</llo_original>
